<compile_context>
chip_gen: v5e
topology: v5e:2x2
jax: 0.10.0
libtpu: 0.0.40
codegen_flags: <defaults>
</compile_context>

<pallas_src>
import functools
import math

import jax
import jax.numpy as jnp
from jax.experimental import pallas as pl
from jax.experimental.pallas import tpu as pltpu


def _round_up(x, m):
    return ((x + m - 1) // m) * m


def _pad2(x, rows, cols):
    return jnp.pad(x, ((0, rows - x.shape[0]), (0, cols - x.shape[1])))


def _pick_row_tile(npd, max_tile_bytes=8 << 20, elem_bytes=4):
    """Largest row-tile height in {512,256,128} dividing npd and fitting VMEM."""
    for tm in (512, 256, 128):
        if npd % tm == 0 and tm * npd * elem_bytes <= max_tile_bytes:
            return tm
    return min(npd, 128)


# --------------------------------------------------------------------------
# Kernel 1: fused multi-layer conv_0_to_0
#   grid = (L, num_row_tiles), both axes sequential ("arbitrary").
#   The x_0 state lives in the resident output block; m0 = x0 @ W0[l] is
#   computed once per layer (at the first row tile) into a VMEM scratch, then
#   each adjacency row tile does relu(A[i] @ m0) into the state.
# --------------------------------------------------------------------------
def _ccxn_x0_kernel(x0_in_ref, w0_ref, adj_ref, o_ref, m0_ref, *, tm):
    l = pl.program_id(0)
    i = pl.program_id(1)
    cdt = m0_ref.dtype

    # Per-layer prologue: feature transform of the current x_0 state.
    @pl.when(jnp.logical_and(i == 0, l == 0))
    def _():
        m0_ref[...] = jnp.dot(
            x0_in_ref[...].astype(cdt), w0_ref[0],
            preferred_element_type=jnp.float32).astype(cdt)

    @pl.when(jnp.logical_and(i == 0, l > 0))
    def _():
        m0_ref[...] = jnp.dot(
            o_ref[...].astype(cdt), w0_ref[0],
            preferred_element_type=jnp.float32).astype(cdt)

    # Neighborhood aggregation for this adjacency row tile (lane-dense store).
    h = jnp.dot(adj_ref[...], m0_ref[...], preferred_element_type=jnp.float32)
    row = pl.multiple_of(i * tm, tm)
    o_ref[pl.ds(row, tm), :] = jnp.maximum(h, 0.0).astype(o_ref.dtype)


# --------------------------------------------------------------------------
# Kernel 2: conv_1_to_2 (only the last layer's result is observable).
#   grid = (num_face_row_tiles,)
# --------------------------------------------------------------------------
def _ccxn_x2_kernel(x1_ref, w12_ref, inc_ref, o2_ref, m1_ref):
    i = pl.program_id(0)
    cdt = m1_ref.dtype

    @pl.when(i == 0)
    def _():
        m1_ref[...] = jnp.dot(
            x1_ref[...].astype(cdt), w12_ref[...],
            preferred_element_type=jnp.float32).astype(cdt)

    h = jnp.dot(inc_ref[...], m1_ref[...], preferred_element_type=jnp.float32)
    o2_ref[...] = jnp.maximum(h, 0.0).astype(o2_ref.dtype)


def ccxn_forward(x_0, x_1, adjacency_0, incidence_2_t, params,
                 *, compute_dtype=jnp.float32):
    """CCXN.forward. params = [(W0_l, W12_l)] per layer. x_1 is a pass-through."""
    n_nodes, c0 = x_0.shape
    n_edges, c1 = x_1.shape
    n_faces = incidence_2_t.shape[0]
    c2 = params[-1][1].shape[1]
    n_layers = len(params)

    w0_stack = jnp.stack([w0 for (w0, _) in params])      # (L, c0, c0)
    w12_last = params[-1][1]                              # (c1, c2)

    # ---- padded, lane-dense sizes ----
    c0p = _round_up(c0, 128)
    c1p = _round_up(c1, 128)
    c2p = _round_up(c2, 128)

    npd = _round_up(n_nodes, 128)
    tm = _pick_row_tile(npd)                              # adjacency row-tile height

    epd = _round_up(n_edges, 128)
    fpd = _round_up(n_faces, 8)
    if fpd > 512:
        fpd = _round_up(fpd, 256)
        tf = 256
    else:
        tf = fpd

    cdt = compute_dtype
    x0_p = _pad2(x_0, npd, c0p).astype(cdt)
    adj_p = _pad2(adjacency_0, npd, npd).astype(cdt)
    w0_p = jnp.pad(w0_stack,
                   ((0, 0), (0, c0p - c0), (0, c0p - c0))).astype(cdt)
    x1_p = _pad2(x_1, epd, c1p).astype(cdt)
    w12_p = _pad2(w12_last, c1p, c2p).astype(cdt)
    inc_p = _pad2(incidence_2_t, fpd, epd).astype(cdt)

    # ---- fused multi-layer node path ----
    x0_out = pl.pallas_call(
        functools.partial(_ccxn_x0_kernel, tm=tm),
        grid=(n_layers, npd // tm),
        out_shape=jax.ShapeDtypeStruct((npd, c0p), x_0.dtype),
        in_specs=[
            pl.BlockSpec((npd, c0p), lambda l, i: (0, 0)),        # x0 input (resident)
            pl.BlockSpec((1, c0p, c0p), lambda l, i: (l, 0, 0)),  # W0[l]
            pl.BlockSpec((tm, npd), lambda l, i: (i, 0)),         # adjacency row tile
        ],
        out_specs=pl.BlockSpec((npd, c0p), lambda l, i: (0, 0)),  # resident x0 state
        scratch_shapes=[pltpu.VMEM((npd, c0p), cdt)],             # m0 = x0 @ W0[l]
        compiler_params=pltpu.CompilerParams(
            dimension_semantics=("arbitrary", "arbitrary")),
    )(x0_p, w0_p, adj_p)

    # ---- single face path (only the last layer's x_2 is returned) ----
    x2_out = pl.pallas_call(
        _ccxn_x2_kernel,
        grid=(fpd // tf,),
        out_shape=jax.ShapeDtypeStruct((fpd, c2p), x_1.dtype),
        in_specs=[
            pl.BlockSpec((epd, c1p), lambda i: (0, 0)),           # x1 (resident)
            pl.BlockSpec((c1p, c2p), lambda i: (0, 0)),           # W12 (last layer)
            pl.BlockSpec((tf, epd), lambda i: (i, 0)),            # incidence row tile
        ],
        out_specs=pl.BlockSpec((tf, c2p), lambda i: (i, 0)),
        scratch_shapes=[pltpu.VMEM((epd, c2p), cdt)],             # m1 = x1 @ W12
        compiler_params=pltpu.CompilerParams(
            dimension_semantics=("arbitrary",)),
    )(x1_p, w12_p, inc_p)

    return x0_out[:n_nodes, :c0], x_1, x2_out[:n_faces, :c2]


def _xavier_uniform(key, shape, gain=1.414):
    # matches torch.nn.init.xavier_uniform_(tensor, gain=1.414) used by Conv.reset_parameters
    fan_in, fan_out = shape
    a = gain * math.sqrt(6.0 / (fan_in + fan_out))
    return jax.random.uniform(key, shape, jnp.float32, minval=-a, maxval=a)


def init_ccxn_params(key, in_channels_0, in_channels_1, in_channels_2, n_layers):
    params = []
    for _ in range(n_layers):
        key, k0, k1 = jax.random.split(key, 3)
        w0 = _xavier_uniform(k0, (in_channels_0, in_channels_0))    # conv_0_to_0.weight
        w12 = _xavier_uniform(k1, (in_channels_1, in_channels_2))   # conv_1_to_2.weight
        params.append((w0, w12))
    return params


def _reference_forward(x_0, x_1, adjacency_0, incidence_2_t, params):
    x2 = None
    for (w0, w12) in params:
        x_0 = jax.nn.relu(adjacency_0 @ (x_0 @ w0))
        x2 = jax.nn.relu(incidence_2_t @ (x_1 @ w12))
    return x_0, x_1, x2


if __name__ == "__main__":
    # small synthetic cell complex
    n_nodes, n_edges, n_faces = 16, 24, 8
    in_channels_0, in_channels_1, in_channels_2 = 8, 8, 8
    n_layers = 2

    key = jax.random.PRNGKey(0)
    k_x0, k_x1, k_adj, k_inc, k_par = jax.random.split(key, 5)

    x_0 = jax.random.normal(k_x0, (n_nodes, in_channels_0), jnp.float32)
    x_1 = jax.random.normal(k_x1, (n_edges, in_channels_1), jnp.float32)
    # synthetic dense adjacency / incidence (0/1 entries), symmetric adjacency
    adj_rnd = jax.random.uniform(k_adj, (n_nodes, n_nodes))
    adjacency_0 = (adj_rnd + adj_rnd.T > 1.4).astype(jnp.float32)
    adjacency_0 = adjacency_0 * (1.0 - jnp.eye(n_nodes, dtype=jnp.float32))
    incidence_2_t = (jax.random.uniform(k_inc, (n_faces, n_edges)) > 0.75).astype(jnp.float32)

    params = init_ccxn_params(k_par, in_channels_0, in_channels_1, in_channels_2, n_layers)

    out_0, out_1, out_2 = ccxn_forward(x_0, x_1, adjacency_0, incidence_2_t, params)
    jax.block_until_ready((out_0, out_1, out_2))

    ref_0, ref_1, ref_2 = _reference_forward(x_0, x_1, adjacency_0, incidence_2_t, params)
    assert out_0.shape == (n_nodes, in_channels_0)
    assert out_1.shape == (n_edges, in_channels_1)
    assert out_2.shape == (n_faces, in_channels_2)
    assert jnp.allclose(out_0, ref_0, atol=1e-4, rtol=1e-4)
    assert jnp.allclose(out_1, ref_1)
    assert jnp.allclose(out_2, ref_2, atol=1e-4, rtol=1e-4)

    print("KERNEL_OK")
</pallas_src>

<mosaic_0001>
module attributes {stable_mosaic.version = 11 : i64} {
  func.func @_ccxn_x0_kernel(%arg0: i32, %arg1: i32, %arg2: memref<128x128xf32, #tpu.memory_space<vmem>>, %arg3: memref<1x128x128xf32, #tpu.memory_space<vmem>>, %arg4: memref<128x128xf32, #tpu.memory_space<vmem>>, %arg5: memref<128x128xf32, #tpu.memory_space<vmem>>, %arg6: memref<128x128xf32, #tpu.memory_space<vmem>>) attributes {dimension_semantics = [#tpu.dimension_semantics<arbitrary>, #tpu.dimension_semantics<arbitrary>], iteration_bounds = array<i64: 2, 1>, scalar_prefetch = 0 : i64, scratch_operands = 1 : i64, tpu.core_type = #tpu.core_type<tc>, window_params = [{pipeline_mode = #tpu.pipeline_mode<synchronous>, transform_indices = @transform_0, window_bounds = array<i64: 128, 128>}, {transform_indices = @transform_1, window_bounds = array<i64: 1, 128, 128>}, {transform_indices = @transform_2, window_bounds = array<i64: 128, 128>}, {pipeline_mode = #tpu.pipeline_mode<synchronous>, transform_indices = @transform_3, window_bounds = array<i64: 128, 128>}]} {
    %c0_i32 = arith.constant 0 : i32
    %0 = arith.cmpi eq, %arg1, %c0_i32 : i32
    %c0_i32_0 = arith.constant 0 : i32
    %1 = arith.cmpi eq, %arg0, %c0_i32_0 : i32
    %2 = arith.andi %0, %1 : i1
    %3 = arith.extui %2 : i1 to i32
    %c0_i32_1 = arith.constant 0 : i32
    %4 = arith.cmpi ne, %3, %c0_i32_1 : i32
    scf.if %4 {
      %c0_10 = arith.constant 0 : index
      %c0_11 = arith.constant 0 : index
      %19 = vector.load %arg2[%c0_10, %c0_11] : memref<128x128xf32, #tpu.memory_space<vmem>>, vector<128x128xf32>
      %c0_12 = arith.constant 0 : index
      %c0_13 = arith.constant 0 : index
      %c0_14 = arith.constant 0 : index
      %20 = vector.load %arg3[%c0_12, %c0_13, %c0_14] : memref<1x128x128xf32, #tpu.memory_space<vmem>>, vector<1x128x128xf32>
      %21 = vector.shape_cast %20 : vector<1x128x128xf32> to vector<128x128xf32>
      %cst_15 = arith.constant dense<0.000000e+00> : vector<128x128xf32>
      %22 = tpu.matmul %19, %21, %cst_15 {dimension_numbers = #tpu.dot_dimension_numbers<[1], [0], [0], [1], [0, 0, 1, 1], [], []>} : vector<128x128xf32>, vector<128x128xf32>, vector<128x128xf32> -> vector<128x128xf32>
      %c0_16 = arith.constant 0 : index
      %c0_17 = arith.constant 0 : index
      %23 = vector.load %arg6[%c0_16, %c0_17] : memref<128x128xf32, #tpu.memory_space<vmem>>, vector<128x128xf32>
      tpu.vector_store %arg6[%c0_16, %c0_17], %22 {strides = array<i32>} : memref<128x128xf32, #tpu.memory_space<vmem>>, vector<128x128xf32>,
    } else {
    }
    %c0_i32_2 = arith.constant 0 : i32
    %5 = arith.cmpi eq, %arg1, %c0_i32_2 : i32
    %c0_i32_3 = arith.constant 0 : i32
    %6 = arith.cmpi sgt, %arg0, %c0_i32_3 : i32
    %7 = arith.andi %5, %6 : i1
    %8 = arith.extui %7 : i1 to i32
    %c0_i32_4 = arith.constant 0 : i32
    %9 = arith.cmpi ne, %8, %c0_i32_4 : i32
    scf.if %9 {
      %c0_10 = arith.constant 0 : index
      %c0_11 = arith.constant 0 : index
      %19 = vector.load %arg5[%c0_10, %c0_11] : memref<128x128xf32, #tpu.memory_space<vmem>>, vector<128x128xf32>
      %c0_12 = arith.constant 0 : index
      %c0_13 = arith.constant 0 : index
      %c0_14 = arith.constant 0 : index
      %20 = vector.load %arg3[%c0_12, %c0_13, %c0_14] : memref<1x128x128xf32, #tpu.memory_space<vmem>>, vector<1x128x128xf32>
      %21 = vector.shape_cast %20 : vector<1x128x128xf32> to vector<128x128xf32>
      %cst_15 = arith.constant dense<0.000000e+00> : vector<128x128xf32>
      %22 = tpu.matmul %19, %21, %cst_15 {dimension_numbers = #tpu.dot_dimension_numbers<[1], [0], [0], [1], [0, 0, 1, 1], [], []>} : vector<128x128xf32>, vector<128x128xf32>, vector<128x128xf32> -> vector<128x128xf32>
      %c0_16 = arith.constant 0 : index
      %c0_17 = arith.constant 0 : index
      %23 = vector.load %arg6[%c0_16, %c0_17] : memref<128x128xf32, #tpu.memory_space<vmem>>, vector<128x128xf32>
      tpu.vector_store %arg6[%c0_16, %c0_17], %22 {strides = array<i32>} : memref<128x128xf32, #tpu.memory_space<vmem>>, vector<128x128xf32>,
    } else {
    }
    %c0 = arith.constant 0 : index
    %c0_5 = arith.constant 0 : index
    %10 = vector.load %arg4[%c0, %c0_5] : memref<128x128xf32, #tpu.memory_space<vmem>>, vector<128x128xf32>
    %c0_6 = arith.constant 0 : index
    %c0_7 = arith.constant 0 : index
    %11 = vector.load %arg6[%c0_6, %c0_7] : memref<128x128xf32, #tpu.memory_space<vmem>>, vector<128x128xf32>
    %cst = arith.constant dense<0.000000e+00> : vector<128x128xf32>
    %12 = tpu.matmul %10, %11, %cst {dimension_numbers = #tpu.dot_dimension_numbers<[1], [0], [0], [1], [0, 0, 1, 1], [], []>} : vector<128x128xf32>, vector<128x128xf32>, vector<128x128xf32> -> vector<128x128xf32>
    %c128_i32 = arith.constant 128 : i32
    %13 = arith.muli %arg1, %c128_i32 : i32
    %14 = tpu.assume_multiple %13, 128 : i32
    %cst_8 = arith.constant 0.000000e+00 : f32
    %15 = vector.broadcast %cst_8 : f32 to vector<128x128xf32>
    %16 = arith.maximumf %12, %15 : vector<128x128xf32>
    %17 = arith.index_cast %14 : i32 to index
    %c0_9 = arith.constant 0 : index
    %18 = vector.load %arg5[%17, %c0_9] : memref<128x128xf32, #tpu.memory_space<vmem>>, vector<128x128xf32>
    tpu.vector_store %arg5[%17, %c0_9], %16 {strides = array<i32>} : memref<128x128xf32, #tpu.memory_space<vmem>>, vector<128x128xf32>,
    return
  }
  func.func @transform_0(%arg0: i32, %arg1: i32) -> (i32, i32) {
    %c0_i32 = arith.constant 0 : i32
    %c0_i32_0 = arith.constant 0 : i32
    %c0_i32_1 = arith.constant 0 : i32
    return %c0_i32, %c0_i32_0 : i32, i32
  }
  func.func @transform_1(%arg0: i32, %arg1: i32) -> (i32, i32, i32) {
    %c0_i32 = arith.constant 0 : i32
    %c0_i32_0 = arith.constant 0 : i32
    %c0_i32_1 = arith.constant 0 : i32
    return %arg0, %c0_i32, %c0_i32_0 : i32, i32, i32
  }
  func.func @transform_2(%arg0: i32, %arg1: i32) -> (i32, i32) {
    %c0_i32 = arith.constant 0 : i32
    %c0_i32_0 = arith.constant 0 : i32
    return %arg1, %c0_i32 : i32, i32
  }
  func.func @transform_3(%arg0: i32, %arg1: i32) -> (i32, i32) {
    %c0_i32 = arith.constant 0 : i32
    %c0_i32_0 = arith.constant 0 : i32
    %c0_i32_1 = arith.constant 0 : i32
    return %c0_i32, %c0_i32_0 : i32, i32
  }
}

</mosaic_0001>

<llo_original>
// kernel: tpu_custom_call.1
$region0: #{tpu_custom_call.1}
  #allocation0 [shape = 'u32[]', space=smem, size = 0x4, offset = 0x4, fixed_abs, tag = 'smem constant byte address 0x4 - core index']
  #allocation1 [shape = 'u32[72,128]{1,0:T(1,128)}', space=vmem, size = 0x9000, scoped, tag = 'internal scratch']
  #allocation2 [shape = 'f32[128,128]{1,0:T(8,128)}', space=vmem, size = 0x10000, scoped, tag = 'scratch operand']
  %s0 = inlined_call_operand.hbm [shape: f32[128,128], index: 0, kind: input, shape index: {}]
  %s1 = inlined_call_operand.hbm [shape: f32[2,128,128], index: 1, kind: input, shape index: {}]
  %s2 = inlined_call_operand.hbm [shape: f32[128,128], index: 2, kind: input, shape index: {}]
  %s3 = inlined_call_operand.hbm [shape: f32[128,128], index: 3, kind: output, shape index: {}]
  %s4 = sld [smem:[#allocation0]]
  $region65: #{tpu_custom_call.1} parent=0
    _
  %s6 = ssub.s32 1, %s4
  %s7 = scalar_select 0, %s6, %s4
  $region1: #{tpu_custom_call.1} parent=0
    #allocation3 [shape = 'u8[65536]{0}', space=vmem, size = 0x10000, scoped, tag = 'input window, operand 0, single buffered']
    #allocation4 [shape = 's32[2]{0}', space=sflag, size = 0x8, scoped, tag = 'scoped memory for tpu_custom_call.1']
    #allocation5 [shape = 's32[2]{0}', space=sflag, size = 0x8, scoped, tag = 'scoped memory for tpu_custom_call.1']
    #allocation6 [shape = 'u8[131072]{0}', space=vmem, size = 0x20000, scoped, tag = 'input window, operand 1']
    #allocation7 [shape = 's32[2]{0}', space=sflag, size = 0x8, scoped, tag = 'scoped memory for tpu_custom_call.1']
    #allocation8 [shape = 'u8[65536]{0}', space=vmem, size = 0x10000, scoped, tag = 'input window, operand 2, single buffered']
    #allocation9 [shape = 'u8[65536]{0}', space=vmem, size = 0x10000, scoped, tag = 'output window, operand 0, single buffered']
    %8 = vsyncpa [#allocation4], 0
    %9 = vsyncpa [#allocation7], 0
    %s10 = scalar_lea.sflag [#allocation7], 1
    %11 = vsyncpa %s10, 0
    %12 = vsyncpa [#allocation5], 0
    loop: start=0, step=1, limit=4
    $region2: #{tpu_custom_call.1} parent=1 // loop_pre_header
      _
    $region3: #{tpu_custom_call.1} parent=1 // loop_header
      %s14 = sphi 0, %s18
      %p15 = scmp.ge.s32.totalorder %s14, 4
      %s21 = sphi 0, %s33
      %s22 = sphi 0, %s29
      %s23 = sphi 0, %s21
      %s24 = sphi 0, %s22
      %s25 = sphi 0, %s23
      %s26 = sphi 0, %s24
      %s34 = sphi 0, %s34
      %s36 = sphi 0, %s34
      %s37 = sphi 0, %s36
      %s51 = sphi 0, %s37
      %s57 = sphi 0, %s59
      %s60 = sphi 0, %s57
      %s61 = sphi 0, %s60
      %s77 = sphi 0, %s61
      %s83 = sphi 0, %s85
      %s86 = sphi 0, %s83
      %s87 = sphi 0, %s86
      %s103 = sphi 0, %s87
      %s107 = sphi 0, %s107
      %s109 = sphi 0, %s107
      %s110 = sphi 0, %s109
      %s124 = sphi 0, %s110
    $region4: #{tpu_custom_call.1} parent=1 // loop_header_branch
      %17 = sbr.rel (%p15) target = $region8
    $region5: #{tpu_custom_call.1} parent=1 // loop_body
      %s19 = ssub.s32 %s14, 1
      %s20 = ssub.s32 %s14, 2
      %s27 = sadd.s32 1, %s22
      %p28 = scmp.ge.s32.totalorder %s27, 1
      %s29 = scalar_select %p28, 0, %s27
      %s30 = sadd.s32 1, %s21
      %s31 = scalar_select %p28, %s30, %s21
      %p32 = scmp.ge.s32.totalorder %s31, 2
      %s33 = scalar_select %p32, 0, %s31
      %s35 = sadd.s32 %s34, 1
      %p38 = scmp.eq.s32.totalorder %s14, 1
      %p39 = scmp.ne.s32.totalorder %s34, %s36
      %p40 = scmp.eq.s32.totalorder %s14, 0
      %p41 = por %p39, %p40
      %p42 = scmp.ne.s32.totalorder %s34, %s36
      %p43 = scmp.eq.s32.totalorder %s19, 1
      %p44 = por %p42, %p43
      %p45 = scmp.ne.s32.totalorder %s36, %s37
      %p46 = scmp.eq.s32.totalorder %s19, 0
      %p47 = por %p45, %p46
      %p48 = scmp.ne.s32.totalorder %s36, %s37
      %p49 = scmp.eq.s32.totalorder %s20, 1
      %p50 = por %p48, %p49
      %p52 = scmp.ne.s32.totalorder %s37, %s51
      %p53 = scmp.eq.s32.totalorder %s20, 0
      %p54 = por %p52, %p53
      %s55 = ssub.s32 %s21, %s33
      %p56 = scmp.eq.s32.totalorder %s55, 0
      %s58 = sadd.s32 %s57, 1
      %s59 = scalar_select %p56, %s57, %s58
      %p62 = pneg %p56
      %p63 = scmp.eq.s32.totalorder %s14, 1
      %p64 = por %p62, %p63
      %p65 = scmp.ne.s32.totalorder %s57, %s60
      %p66 = scmp.eq.s32.totalorder %s14, 0
      %p67 = por %p65, %p66
      %p68 = scmp.ne.s32.totalorder %s57, %s60
      %p69 = scmp.eq.s32.totalorder %s19, 1
      %p70 = por %p68, %p69
      %p71 = scmp.ne.s32.totalorder %s60, %s61
      %p72 = scmp.eq.s32.totalorder %s19, 0
      %p73 = por %p71, %p72
      %p74 = scmp.ne.s32.totalorder %s60, %s61
      %p75 = scmp.eq.s32.totalorder %s20, 1
      %p76 = por %p74, %p75
      %p78 = scmp.ne.s32.totalorder %s61, %s77
      %p79 = scmp.eq.s32.totalorder %s20, 0
      %p80 = por %p78, %p79
      %s81 = ssub.s32 %s22, %s29
      %p82 = scmp.eq.s32.totalorder %s81, 0
      %s84 = sadd.s32 %s83, 1
      %s85 = scalar_select %p82, %s83, %s84
      %p88 = pneg %p82
      %p89 = scmp.eq.s32.totalorder %s14, 1
      %p90 = por %p88, %p89
      %p91 = scmp.ne.s32.totalorder %s83, %s86
      %p92 = scmp.eq.s32.totalorder %s14, 0
      %p93 = por %p91, %p92
      %p94 = scmp.ne.s32.totalorder %s83, %s86
      %p95 = scmp.eq.s32.totalorder %s19, 1
      %p96 = por %p94, %p95
      %p97 = scmp.ne.s32.totalorder %s86, %s87
      %p98 = scmp.eq.s32.totalorder %s19, 0
      %p99 = por %p97, %p98
      %p100 = scmp.ne.s32.totalorder %s86, %s87
      %p101 = scmp.eq.s32.totalorder %s20, 1
      %p102 = por %p100, %p101
      %p104 = scmp.ne.s32.totalorder %s87, %s103
      %p105 = scmp.eq.s32.totalorder %s20, 0
      %p106 = por %p104, %p105
      %s108 = sadd.s32 %s107, 1
      %p111 = scmp.eq.s32.totalorder %s14, 1
      %p112 = scmp.ne.s32.totalorder %s107, %s109
      %p113 = scmp.eq.s32.totalorder %s14, 0
      %p114 = por %p112, %p113
      %p115 = scmp.ne.s32.totalorder %s107, %s109
      %p116 = scmp.eq.s32.totalorder %s19, 1
      %p117 = por %p115, %p116
      %p118 = scmp.ne.s32.totalorder %s109, %s110
      %p119 = scmp.eq.s32.totalorder %s19, 0
      %p120 = por %p118, %p119
      %p121 = scmp.ne.s32.totalorder %s109, %s110
      %p122 = scmp.eq.s32.totalorder %s20, 1
      %p123 = por %p121, %p122
      %p125 = scmp.ne.s32.totalorder %s110, %s124
      %p126 = scmp.eq.s32.totalorder %s20, 0
      %p127 = por %p125, %p126
      %p128 = scmp.le.s32.totalorder 1, %s14
      %p129 = scmp.lt.s32.totalorder %s14, 3
      %p130 = pnand %p128, %p129
      %p131 = pneg %p130
      // Predicated region
      $region9: #{tpu_custom_call.1} parent=5 // pred_check
        _
      $region10: #{tpu_custom_call.1} parent=5 // pred_check_branch
        %133 = sbr.rel (%p130) target = $region12
      $region11: #{tpu_custom_call.1} parent=5 // pred_region
        %s134 = ssub.s32 %s14, 1
        // Predicated region
        $region13: #{tpu_custom_call.1} parent=11 // pred_check
          %p135 = pneg %p47
        $region14: #{tpu_custom_call.1} parent=11 // pred_check_branch
          %137 = sbr.rel (%p135) target = $region16
        $region15: #{tpu_custom_call.1} parent=11 // pred_region
          %139 = vsyncadd [#allocation4], 0
          %s140 = sshll.u32 %s0, 4
          %s141 = int_to_ptr.hbm [resolvable:$true] %s140
          %s142 = sshll.u32 [#allocation3], 4
          %s143 = int_to_ptr.vmem [resolvable:$true] %s142
          %148 = dma.hbm_to_vmem [thread:$0]  %s141, 2048, %s143, [#allocation4], 128, 128, 8
        $region16: #{tpu_custom_call.1} parent=11 // pred_fallthru
          _
        // Predicated region
        $region17: #{tpu_custom_call.1} parent=11 // pred_check
          %p149 = pneg %p99
        $region18: #{tpu_custom_call.1} parent=11 // pred_check_branch
          %151 = sbr.rel (%p149) target = $region20
        $region19: #{tpu_custom_call.1} parent=11 // pred_region
          %s152 = smul.u32 16, %s24
          %154 = vsyncadd [#allocation7], 0
          %s155 = smul.addr %s152, 8
          %s156 = scalar_lea.hbm %s2, %s155
          %s157 = sshll.u32 %s156, 4
          %s158 = int_to_ptr.hbm [resolvable:$true] %s157
          %s159 = sshll.u32 [#allocation8], 4
          %s160 = int_to_ptr.vmem [resolvable:$true] %s159
          %165 = dma.hbm_to_vmem [thread:$0]  %s158, 2048, %s160, [#allocation7], 128, 128, 8
        $region20: #{tpu_custom_call.1} parent=11 // pred_fallthru
          _
      $region12: #{tpu_custom_call.1} parent=5 // pred_fallthru
        _
      %p166 = scmp.lt.s32.totalorder %s14, 2
      // Predicated region
      $region21: #{tpu_custom_call.1} parent=5 // pred_check
        %p167 = pneg %p166
      $region22: #{tpu_custom_call.1} parent=5 // pred_check_branch
        %169 = sbr.rel (%p167) target = $region24
      $region23: #{tpu_custom_call.1} parent=5 // pred_region
        // Predicated region
        $region25: #{tpu_custom_call.1} parent=23 // pred_check
          %p170 = pneg %p67
        $region26: #{tpu_custom_call.1} parent=23 // pred_check_branch
          %172 = sbr.rel (%p170) target = $region28
        $region27: #{tpu_custom_call.1} parent=23 // pred_region
          %s173 = sand.u32 %s14, 1
          %s174 = scalar_lea.sflag [#allocation7], %s173
          %s175 = sand.u32 %s57, 1
          %s176 = smul.addr %s175, 128
          %s177 = scalar_lea.vmem [#allocation6], %s176
          %179 = vsyncadd %s174, 0
          %s180 = smul.addr %s21, 16
          %s181 = smul.addr %s180, 8
          %s182 = scalar_lea.hbm %s1, %s181
          %s183 = sshll.u32 %s182, 4
          %s184 = int_to_ptr.hbm [resolvable:$true] %s183
          %s185 = sshll.u32 %s177, 4
          %s186 = int_to_ptr.vmem [resolvable:$true] %s185
          %191 = dma.hbm_to_vmem [thread:$0]  %s184, 2048, %s186, %s174, 128, 128, 8
        $region28: #{tpu_custom_call.1} parent=23 // pred_fallthru
          _
      $region24: #{tpu_custom_call.1} parent=5 // pred_fallthru
        _
      %p192 = scmp.le.s32.totalorder 1, %s14
      %p193 = scmp.lt.s32.totalorder %s14, 3
      %p194 = pnand %p192, %p193
      %p195 = pneg %p194
      // Predicated region
      $region29: #{tpu_custom_call.1} parent=5 // pred_check
        _
      $region30: #{tpu_custom_call.1} parent=5 // pred_check_branch
        %197 = sbr.rel (%p194) target = $region32
      $region31: #{tpu_custom_call.1} parent=5 // pred_region
        %s198 = ssub.s32 %s14, 1
        // Predicated region
        $region33: #{tpu_custom_call.1} parent=31 // pred_check
          %p199 = pneg %p47
        $region34: #{tpu_custom_call.1} parent=31 // pred_check_branch
          %201 = sbr.rel (%p199) target = $region36
        $region35: #{tpu_custom_call.1} parent=31 // pred_region
          %203 = dma.done [#allocation4], 2048
        $region36: #{tpu_custom_call.1} parent=31 // pred_fallthru
          _
        %s204 = sand.u32 %s19, 1
        %s205 = scalar_lea.sflag [#allocation7], %s204
        %s206 = sand.u32 %s60, 1
        %s207 = smul.addr %s206, 128
        %s208 = scalar_lea.vmem [#allocation6], %s207
        // Predicated region
        $region37: #{tpu_custom_call.1} parent=31 // pred_check
          %p209 = pneg %p73
        $region38: #{tpu_custom_call.1} parent=31 // pred_check_branch
          %211 = sbr.rel (%p209) target = $region40
        $region39: #{tpu_custom_call.1} parent=31 // pred_region
          %213 = dma.done %s205, 2048
        $region40: #{tpu_custom_call.1} parent=31 // pred_fallthru
          _
        // Predicated region
        $region41: #{tpu_custom_call.1} parent=31 // pred_check
          %p214 = pneg %p99
        $region42: #{tpu_custom_call.1} parent=31 // pred_check_branch
          %216 = sbr.rel (%p214) target = $region44
        $region43: #{tpu_custom_call.1} parent=31 // pred_region
          %218 = dma.done [#allocation7], 2048
        $region44: #{tpu_custom_call.1} parent=31 // pred_fallthru
          _
        %p219 = pneg %p47
        %p220 = pneg %p44
        %s221 = sand.u32 %s19, 1
        %s222 = scalar_lea.sflag [#allocation7], %s221
        %s223 = sand.u32 %s60, 1
        %s224 = smul.addr %s223, 128
        %s225 = scalar_lea.vmem [#allocation6], %s224
        %p226 = pneg %p73
        %p227 = pneg %p70
        %p228 = pneg %p99
        %p229 = pneg %p96
        %p230 = pneg %p120
        %p231 = pneg %p117
        %s232 = smul.u32 16, %s24
        %p233 = scmp.eq.s32.totalorder %s24, 0
        %p234 = scmp.eq.s32.totalorder %s23, 0
        %p235 = pnand %p233, %p234
        %p236 = pneg %p235
        // Predicated region
        $region45: #{tpu_custom_call.1} parent=31 // pred_check
          _
        $region46: #{tpu_custom_call.1} parent=31 // pred_check_branch
          %238 = sbr.rel (%p235) target = $region48
        $region47: #{tpu_custom_call.1} parent=31 // pred_region
          %v239 = vld [vmem:[#allocation3] sm:$0xff]
          %v240 = vld [vmem:[#allocation3 + $0x8] sm:$0xff]
          %v241 = vld [vmem:[#allocation3 + $0x10] sm:$0xff]
          %v242 = vld [vmem:[#allocation3 + $0x18] sm:$0xff]
          %v243 = vld [vmem:[#allocation3 + $0x20] sm:$0xff]
          %v244 = vld [vmem:[#allocation3 + $0x28] sm:$0xff]
          %v245 = vld [vmem:[#allocation3 + $0x30] sm:$0xff]
          %v246 = vld [vmem:[#allocation3 + $0x38] sm:$0xff]
          %v247 = vld [vmem:[#allocation3 + $0x40] sm:$0xff]
          %v248 = vld [vmem:[#allocation3 + $0x48] sm:$0xff]
          %v249 = vld [vmem:[#allocation3 + $0x50] sm:$0xff]
          %v250 = vld [vmem:[#allocation3 + $0x58] sm:$0xff]
          %v251 = vld [vmem:[#allocation3 + $0x60] sm:$0xff]
          %v252 = vld [vmem:[#allocation3 + $0x68] sm:$0xff]
          %v253 = vld [vmem:[#allocation3 + $0x70] sm:$0xff]
          %v254 = vld [vmem:[#allocation3 + $0x78] sm:$0xff]
          %v255 = vld [vmem:[%s208] sm:$0xff]
          %v256 = vld [vmem:[%s208 + $0x8] sm:$0xff]
          %v257 = vld [vmem:[%s208 + $0x10] sm:$0xff]
          %v258 = vld [vmem:[%s208 + $0x18] sm:$0xff]
          %v259 = vld [vmem:[%s208 + $0x20] sm:$0xff]
          %v260 = vld [vmem:[%s208 + $0x28] sm:$0xff]
          %v261 = vld [vmem:[%s208 + $0x30] sm:$0xff]
          %v262 = vld [vmem:[%s208 + $0x38] sm:$0xff]
          %v263 = vld [vmem:[%s208 + $0x40] sm:$0xff]
          %v264 = vld [vmem:[%s208 + $0x48] sm:$0xff]
          %v265 = vld [vmem:[%s208 + $0x50] sm:$0xff]
          %v266 = vld [vmem:[%s208 + $0x58] sm:$0xff]
          %v267 = vld [vmem:[%s208 + $0x60] sm:$0xff]
          %v268 = vld [vmem:[%s208 + $0x68] sm:$0xff]
          %v269 = vld [vmem:[%s208 + $0x70] sm:$0xff]
          %v270 = vld [vmem:[%s208 + $0x78] sm:$0xff]
          %271 = vmatpush.msra.mxu0 %v270
          %272 = vmatpush.msra.mxu0 %v269
          %273 = vmatpush.msra.mxu0 %v268
          %274 = vmatpush.msra.mxu0 %v267
          %275 = vmatpush.msra.mxu0 %v266
          %276 = vmatpush.msra.mxu0 %v265
          %277 = vmatpush.msra.mxu0 %v264
          %278 = vmatpush.msra.mxu0 %v263
          %279 = vmatpush.msra.mxu0 %v262
          %280 = vmatpush.msra.mxu0 %v261
          %281 = vmatpush.msra.mxu0 %v260
          %282 = vmatpush.msra.mxu0 %v259
          %283 = vmatpush.msra.mxu0 %v258
          %284 = vmatpush.msra.mxu0 %v257
          %285 = vmatpush.msra.mxu0 %v256
          %286 = vmatpush.msra.mxu0 %v255
          %287 = vmatmul.f32.gmra.mxu0 %v239
          %v288 = vpop.f32.mrf.mxu0
          %v289 = vadd.f32 0.0, %v288
          %290 = vmatmul.f32.gmra.mxu0 %v240
          %v291 = vpop.f32.mrf.mxu0
          %v292 = vadd.f32 0.0, %v291
          %293 = vmatmul.f32.gmra.mxu0 %v241
          %v294 = vpop.f32.mrf.mxu0
          %v295 = vadd.f32 0.0, %v294
          %296 = vmatmul.f32.gmra.mxu0 %v242
          %v297 = vpop.f32.mrf.mxu0
          %v298 = vadd.f32 0.0, %v297
          %299 = vmatmul.f32.gmra.mxu0 %v243
          %v300 = vpop.f32.mrf.mxu0
          %v301 = vadd.f32 0.0, %v300
          %302 = vmatmul.f32.gmra.mxu0 %v244
          %v303 = vpop.f32.mrf.mxu0
          %v304 = vadd.f32 0.0, %v303
          %305 = vmatmul.f32.gmra.mxu0 %v245
          %v306 = vpop.f32.mrf.mxu0
          %v307 = vadd.f32 0.0, %v306
          %308 = vmatmul.f32.gmra.mxu0 %v246
          %v309 = vpop.f32.mrf.mxu0
          %v310 = vadd.f32 0.0, %v309
          %311 = vmatmul.f32.gmra.mxu0 %v247
          %v312 = vpop.f32.mrf.mxu0
          %v313 = vadd.f32 0.0, %v312
          %314 = vmatmul.f32.gmra.mxu0 %v248
          %v315 = vpop.f32.mrf.mxu0
          %v316 = vadd.f32 0.0, %v315
          %317 = vmatmul.f32.gmra.mxu0 %v249
          %v318 = vpop.f32.mrf.mxu0
          %v319 = vadd.f32 0.0, %v318
          %320 = vmatmul.f32.gmra.mxu0 %v250
          %v321 = vpop.f32.mrf.mxu0
          %v322 = vadd.f32 0.0, %v321
          %323 = vmatmul.f32.gmra.mxu0 %v251
          %v324 = vpop.f32.mrf.mxu0
          %v325 = vadd.f32 0.0, %v324
          %326 = vmatmul.f32.gmra.mxu0 %v252
          %v327 = vpop.f32.mrf.mxu0
          %v328 = vadd.f32 0.0, %v327
          %329 = vmatmul.f32.gmra.mxu0 %v253
          %v330 = vpop.f32.mrf.mxu0
          %v331 = vadd.f32 0.0, %v330
          %332 = vmatmul.f32.gmra.mxu0 %v254
          %v333 = vpop.f32.mrf.mxu0
          %v334 = vadd.f32 0.0, %v333
          %335 = vdwg.mxu0
          %336 = vst [vmem:[#allocation2] sm:$0xff] %v289
          %337 = vst [vmem:[#allocation2 + $0x8] sm:$0xff] %v292
          %338 = vst [vmem:[#allocation2 + $0x10] sm:$0xff] %v295
          %339 = vst [vmem:[#allocation2 + $0x18] sm:$0xff] %v298
          %340 = vst [vmem:[#allocation2 + $0x20] sm:$0xff] %v301
          %341 = vst [vmem:[#allocation2 + $0x28] sm:$0xff] %v304
          %342 = vst [vmem:[#allocation2 + $0x30] sm:$0xff] %v307
          %343 = vst [vmem:[#allocation2 + $0x38] sm:$0xff] %v310
          %344 = vst [vmem:[#allocation2 + $0x40] sm:$0xff] %v313
          %345 = vst [vmem:[#allocation2 + $0x48] sm:$0xff] %v316
          %346 = vst [vmem:[#allocation2 + $0x50] sm:$0xff] %v319
          %347 = vst [vmem:[#allocation2 + $0x58] sm:$0xff] %v322
          %348 = vst [vmem:[#allocation2 + $0x60] sm:$0xff] %v325
          %349 = vst [vmem:[#allocation2 + $0x68] sm:$0xff] %v328
          %350 = vst [vmem:[#allocation2 + $0x70] sm:$0xff] %v331
          %351 = vst [vmem:[#allocation2 + $0x78] sm:$0xff] %v334
        $region48: #{tpu_custom_call.1} parent=31 // pred_fallthru
          _
        %p352 = scmp.gt.s32.totalorder %s23, 0
        %p353 = pnand %p233, %p352
        %p354 = pneg %p353
        // Predicated region
        $region49: #{tpu_custom_call.1} parent=31 // pred_check
          _
        $region50: #{tpu_custom_call.1} parent=31 // pred_check_branch
          %356 = sbr.rel (%p353) target = $region52
        $region51: #{tpu_custom_call.1} parent=31 // pred_region
          %v357 = vld [vmem:[#allocation9] sm:$0xff]
          %v358 = vld [vmem:[#allocation9 + $0x8] sm:$0xff]
          %v359 = vld [vmem:[#allocation9 + $0x10] sm:$0xff]
          %v360 = vld [vmem:[#allocation9 + $0x18] sm:$0xff]
          %v361 = vld [vmem:[#allocation9 + $0x20] sm:$0xff]
          %v362 = vld [vmem:[#allocation9 + $0x28] sm:$0xff]
          %v363 = vld [vmem:[#allocation9 + $0x30] sm:$0xff]
          %v364 = vld [vmem:[#allocation9 + $0x38] sm:$0xff]
          %v365 = vld [vmem:[#allocation9 + $0x40] sm:$0xff]
          %v366 = vld [vmem:[#allocation9 + $0x48] sm:$0xff]
          %v367 = vld [vmem:[#allocation9 + $0x50] sm:$0xff]
          %v368 = vld [vmem:[#allocation9 + $0x58] sm:$0xff]
          %v369 = vld [vmem:[#allocation9 + $0x60] sm:$0xff]
          %v370 = vld [vmem:[#allocation9 + $0x68] sm:$0xff]
          %v371 = vld [vmem:[#allocation9 + $0x70] sm:$0xff]
          %v372 = vld [vmem:[#allocation9 + $0x78] sm:$0xff]
          %v373 = vld [vmem:[%s208] sm:$0xff]
          %v374 = vld [vmem:[%s208 + $0x8] sm:$0xff]
          %v375 = vld [vmem:[%s208 + $0x10] sm:$0xff]
          %v376 = vld [vmem:[%s208 + $0x18] sm:$0xff]
          %v377 = vld [vmem:[%s208 + $0x20] sm:$0xff]
          %v378 = vld [vmem:[%s208 + $0x28] sm:$0xff]
          %v379 = vld [vmem:[%s208 + $0x30] sm:$0xff]
          %v380 = vld [vmem:[%s208 + $0x38] sm:$0xff]
          %v381 = vld [vmem:[%s208 + $0x40] sm:$0xff]
          %v382 = vld [vmem:[%s208 + $0x48] sm:$0xff]
          %v383 = vld [vmem:[%s208 + $0x50] sm:$0xff]
          %v384 = vld [vmem:[%s208 + $0x58] sm:$0xff]
          %v385 = vld [vmem:[%s208 + $0x60] sm:$0xff]
          %v386 = vld [vmem:[%s208 + $0x68] sm:$0xff]
          %v387 = vld [vmem:[%s208 + $0x70] sm:$0xff]
          %v388 = vld [vmem:[%s208 + $0x78] sm:$0xff]
          %389 = vmatpush.msra.mxu0 %v388
          %390 = vmatpush.msra.mxu0 %v387
          %391 = vmatpush.msra.mxu0 %v386
          %392 = vmatpush.msra.mxu0 %v385
          %393 = vmatpush.msra.mxu0 %v384
          %394 = vmatpush.msra.mxu0 %v383
          %395 = vmatpush.msra.mxu0 %v382
          %396 = vmatpush.msra.mxu0 %v381
          %397 = vmatpush.msra.mxu0 %v380
          %398 = vmatpush.msra.mxu0 %v379
          %399 = vmatpush.msra.mxu0 %v378
          %400 = vmatpush.msra.mxu0 %v377
          %401 = vmatpush.msra.mxu0 %v376
          %402 = vmatpush.msra.mxu0 %v375
          %403 = vmatpush.msra.mxu0 %v374
          %404 = vmatpush.msra.mxu0 %v373
          %405 = vmatmul.f32.gmra.mxu0 %v357
          %v406 = vpop.f32.mrf.mxu0
          %v407 = vadd.f32 0.0, %v406
          %408 = vmatmul.f32.gmra.mxu0 %v358
          %v409 = vpop.f32.mrf.mxu0
          %v410 = vadd.f32 0.0, %v409
          %411 = vmatmul.f32.gmra.mxu0 %v359
          %v412 = vpop.f32.mrf.mxu0
          %v413 = vadd.f32 0.0, %v412
          %414 = vmatmul.f32.gmra.mxu0 %v360
          %v415 = vpop.f32.mrf.mxu0
          %v416 = vadd.f32 0.0, %v415
          %417 = vmatmul.f32.gmra.mxu0 %v361
          %v418 = vpop.f32.mrf.mxu0
          %v419 = vadd.f32 0.0, %v418
          %420 = vmatmul.f32.gmra.mxu0 %v362
          %v421 = vpop.f32.mrf.mxu0
          %v422 = vadd.f32 0.0, %v421
          %423 = vmatmul.f32.gmra.mxu0 %v363
          %v424 = vpop.f32.mrf.mxu0
          %v425 = vadd.f32 0.0, %v424
          %426 = vmatmul.f32.gmra.mxu0 %v364
          %v427 = vpop.f32.mrf.mxu0
          %v428 = vadd.f32 0.0, %v427
          %429 = vmatmul.f32.gmra.mxu0 %v365
          %v430 = vpop.f32.mrf.mxu0
          %v431 = vadd.f32 0.0, %v430
          %432 = vmatmul.f32.gmra.mxu0 %v366
          %v433 = vpop.f32.mrf.mxu0
          %v434 = vadd.f32 0.0, %v433
          %435 = vmatmul.f32.gmra.mxu0 %v367
          %v436 = vpop.f32.mrf.mxu0
          %v437 = vadd.f32 0.0, %v436
          %438 = vmatmul.f32.gmra.mxu0 %v368
          %v439 = vpop.f32.mrf.mxu0
          %v440 = vadd.f32 0.0, %v439
          %441 = vmatmul.f32.gmra.mxu0 %v369
          %v442 = vpop.f32.mrf.mxu0
          %v443 = vadd.f32 0.0, %v442
          %444 = vmatmul.f32.gmra.mxu0 %v370
          %v445 = vpop.f32.mrf.mxu0
          %v446 = vadd.f32 0.0, %v445
          %447 = vmatmul.f32.gmra.mxu0 %v371
          %v448 = vpop.f32.mrf.mxu0
          %v449 = vadd.f32 0.0, %v448
          %450 = vmatmul.f32.gmra.mxu0 %v372
          %v451 = vpop.f32.mrf.mxu0
          %v452 = vadd.f32 0.0, %v451
          %453 = vdwg.mxu0
          %454 = vst [vmem:[#allocation2] sm:$0xff] %v407
          %455 = vst [vmem:[#allocation2 + $0x8] sm:$0xff] %v410
          %456 = vst [vmem:[#allocation2 + $0x10] sm:$0xff] %v413
          %457 = vst [vmem:[#allocation2 + $0x18] sm:$0xff] %v416
          %458 = vst [vmem:[#allocation2 + $0x20] sm:$0xff] %v419
          %459 = vst [vmem:[#allocation2 + $0x28] sm:$0xff] %v422
          %460 = vst [vmem:[#allocation2 + $0x30] sm:$0xff] %v425
          %461 = vst [vmem:[#allocation2 + $0x38] sm:$0xff] %v428
          %462 = vst [vmem:[#allocation2 + $0x40] sm:$0xff] %v431
          %463 = vst [vmem:[#allocation2 + $0x48] sm:$0xff] %v434
          %464 = vst [vmem:[#allocation2 + $0x50] sm:$0xff] %v437
          %465 = vst [vmem:[#allocation2 + $0x58] sm:$0xff] %v440
          %466 = vst [vmem:[#allocation2 + $0x60] sm:$0xff] %v443
          %467 = vst [vmem:[#allocation2 + $0x68] sm:$0xff] %v446
          %468 = vst [vmem:[#allocation2 + $0x70] sm:$0xff] %v449
          %469 = vst [vmem:[#allocation2 + $0x78] sm:$0xff] %v452
        $region52: #{tpu_custom_call.1} parent=31 // pred_fallthru
          _
        %v470 = vld [vmem:[#allocation8] sm:$0xff]
        %v471 = vld [vmem:[#allocation8 + $0x8] sm:$0xff]
        %v472 = vld [vmem:[#allocation8 + $0x10] sm:$0xff]
        %v473 = vld [vmem:[#allocation8 + $0x18] sm:$0xff]
        %v474 = vld [vmem:[#allocation8 + $0x20] sm:$0xff]
        %v475 = vld [vmem:[#allocation8 + $0x28] sm:$0xff]
        %v476 = vld [vmem:[#allocation8 + $0x30] sm:$0xff]
        %v477 = vld [vmem:[#allocation8 + $0x38] sm:$0xff]
        %v478 = vld [vmem:[#allocation8 + $0x40] sm:$0xff]
        %v479 = vld [vmem:[#allocation8 + $0x48] sm:$0xff]
        %v480 = vld [vmem:[#allocation8 + $0x50] sm:$0xff]
        %v481 = vld [vmem:[#allocation8 + $0x58] sm:$0xff]
        %v482 = vld [vmem:[#allocation8 + $0x60] sm:$0xff]
        %v483 = vld [vmem:[#allocation8 + $0x68] sm:$0xff]
        %v484 = vld [vmem:[#allocation8 + $0x70] sm:$0xff]
        %v485 = vld [vmem:[#allocation8 + $0x78] sm:$0xff]
        %v486 = vld [vmem:[#allocation2] sm:$0xff]
        %v487 = vld [vmem:[#allocation2 + $0x8] sm:$0xff]
        %v488 = vld [vmem:[#allocation2 + $0x10] sm:$0xff]
        %v489 = vld [vmem:[#allocation2 + $0x18] sm:$0xff]
        %v490 = vld [vmem:[#allocation2 + $0x20] sm:$0xff]
        %v491 = vld [vmem:[#allocation2 + $0x28] sm:$0xff]
        %v492 = vld [vmem:[#allocation2 + $0x30] sm:$0xff]
        %v493 = vld [vmem:[#allocation2 + $0x38] sm:$0xff]
        %v494 = vld [vmem:[#allocation2 + $0x40] sm:$0xff]
        %v495 = vld [vmem:[#allocation2 + $0x48] sm:$0xff]
        %v496 = vld [vmem:[#allocation2 + $0x50] sm:$0xff]
        %v497 = vld [vmem:[#allocation2 + $0x58] sm:$0xff]
        %v498 = vld [vmem:[#allocation2 + $0x60] sm:$0xff]
        %v499 = vld [vmem:[#allocation2 + $0x68] sm:$0xff]
        %v500 = vld [vmem:[#allocation2 + $0x70] sm:$0xff]
        %v501 = vld [vmem:[#allocation2 + $0x78] sm:$0xff]
        %502 = vmatpush.msra.mxu0 %v501
        %503 = vmatpush.msra.mxu0 %v500
        %504 = vmatpush.msra.mxu0 %v499
        %505 = vmatpush.msra.mxu0 %v498
        %506 = vmatpush.msra.mxu0 %v497
        %507 = vmatpush.msra.mxu0 %v496
        %508 = vmatpush.msra.mxu0 %v495
        %509 = vmatpush.msra.mxu0 %v494
        %510 = vmatpush.msra.mxu0 %v493
        %511 = vmatpush.msra.mxu0 %v492
        %512 = vmatpush.msra.mxu0 %v491
        %513 = vmatpush.msra.mxu0 %v490
        %514 = vmatpush.msra.mxu0 %v489
        %515 = vmatpush.msra.mxu0 %v488
        %516 = vmatpush.msra.mxu0 %v487
        %517 = vmatpush.msra.mxu0 %v486
        %518 = vmatmul.f32.gmra.mxu0 %v470
        %v519 = vpop.f32.mrf.mxu0
        %v520 = vadd.f32 0.0, %v519
        %521 = vmatmul.f32.gmra.mxu0 %v471
        %v522 = vpop.f32.mrf.mxu0
        %v523 = vadd.f32 0.0, %v522
        %524 = vmatmul.f32.gmra.mxu0 %v472
        %v525 = vpop.f32.mrf.mxu0
        %v526 = vadd.f32 0.0, %v525
        %527 = vmatmul.f32.gmra.mxu0 %v473
        %v528 = vpop.f32.mrf.mxu0
        %v529 = vadd.f32 0.0, %v528
        %530 = vmatmul.f32.gmra.mxu0 %v474
        %v531 = vpop.f32.mrf.mxu0
        %v532 = vadd.f32 0.0, %v531
        %533 = vmatmul.f32.gmra.mxu0 %v475
        %v534 = vpop.f32.mrf.mxu0
        %v535 = vadd.f32 0.0, %v534
        %536 = vmatmul.f32.gmra.mxu0 %v476
        %v537 = vpop.f32.mrf.mxu0
        %v538 = vadd.f32 0.0, %v537
        %539 = vmatmul.f32.gmra.mxu0 %v477
        %v540 = vpop.f32.mrf.mxu0
        %v541 = vadd.f32 0.0, %v540
        %542 = vmatmul.f32.gmra.mxu0 %v478
        %v543 = vpop.f32.mrf.mxu0
        %v544 = vadd.f32 0.0, %v543
        %545 = vmatmul.f32.gmra.mxu0 %v479
        %v546 = vpop.f32.mrf.mxu0
        %v547 = vadd.f32 0.0, %v546
        %548 = vmatmul.f32.gmra.mxu0 %v480
        %v549 = vpop.f32.mrf.mxu0
        %v550 = vadd.f32 0.0, %v549
        %551 = vmatmul.f32.gmra.mxu0 %v481
        %v552 = vpop.f32.mrf.mxu0
        %v553 = vadd.f32 0.0, %v552
        %554 = vmatmul.f32.gmra.mxu0 %v482
        %v555 = vpop.f32.mrf.mxu0
        %v556 = vadd.f32 0.0, %v555
        %557 = vmatmul.f32.gmra.mxu0 %v483
        %v558 = vpop.f32.mrf.mxu0
        %v559 = vadd.f32 0.0, %v558
        %560 = vmatmul.f32.gmra.mxu0 %v484
        %v561 = vpop.f32.mrf.mxu0
        %v562 = vadd.f32 0.0, %v561
        %563 = vmatmul.f32.gmra.mxu0 %v485
        %v564 = vpop.f32.mrf.mxu0
        %v565 = vadd.f32 0.0, %v564
        %566 = vdwg.mxu0
        %s567 = smul.u32 %s24, 128
        %v568 = vmax.f32 %v520, 0.0
        %v569 = vmax.f32 %v523, 0.0
        %v570 = vmax.f32 %v526, 0.0
        %v571 = vmax.f32 %v529, 0.0
        %v572 = vmax.f32 %v532, 0.0
        %v573 = vmax.f32 %v535, 0.0
        %v574 = vmax.f32 %v538, 0.0
        %v575 = vmax.f32 %v541, 0.0
        %v576 = vmax.f32 %v544, 0.0
        %v577 = vmax.f32 %v547, 0.0
        %v578 = vmax.f32 %v550, 0.0
        %v579 = vmax.f32 %v553, 0.0
        %v580 = vmax.f32 %v556, 0.0
        %v581 = vmax.f32 %v559, 0.0
        %v582 = vmax.f32 %v562, 0.0
        %v583 = vmax.f32 %v565, 0.0
        %s584 = scalar_lea.vmem [#allocation9], %s567
        %585 = vst [vmem:[%s584] sm:$0xff] %v568
        %586 = vst [vmem:[%s584 + $0x8] sm:$0xff] %v569
        %587 = vst [vmem:[%s584 + $0x10] sm:$0xff] %v570
        %588 = vst [vmem:[%s584 + $0x18] sm:$0xff] %v571
        %589 = vst [vmem:[%s584 + $0x20] sm:$0xff] %v572
        %590 = vst [vmem:[%s584 + $0x28] sm:$0xff] %v573
        %591 = vst [vmem:[%s584 + $0x30] sm:$0xff] %v574
        %592 = vst [vmem:[%s584 + $0x38] sm:$0xff] %v575
        %593 = vst [vmem:[%s584 + $0x40] sm:$0xff] %v576
        %594 = vst [vmem:[%s584 + $0x48] sm:$0xff] %v577
        %595 = vst [vmem:[%s584 + $0x50] sm:$0xff] %v578
        %596 = vst [vmem:[%s584 + $0x58] sm:$0xff] %v579
        %597 = vst [vmem:[%s584 + $0x60] sm:$0xff] %v580
        %598 = vst [vmem:[%s584 + $0x68] sm:$0xff] %v581
        %599 = vst [vmem:[%s584 + $0x70] sm:$0xff] %v582
        %600 = vst [vmem:[%s584 + $0x78] sm:$0xff] %v583
        // Predicated region
        $region53: #{tpu_custom_call.1} parent=31 // pred_check
          %p601 = pneg %p117
        $region54: #{tpu_custom_call.1} parent=31 // pred_check_branch
          %603 = sbr.rel (%p601) target = $region56
        $region55: #{tpu_custom_call.1} parent=31 // pred_region
          %605 = vsyncadd [#allocation5], 0
          %s606 = sshll.u32 [#allocation9], 4
          %s607 = int_to_ptr.vmem [resolvable:$true] %s606
          %s608 = sshll.u32 %s3, 4
          %s609 = int_to_ptr.hbm [resolvable:$true] %s608
          %614 = dma.vmem_to_hbm [thread:$0]  %s607, 2048, %s609, [#allocation5], 128, 128, 8
        $region56: #{tpu_custom_call.1} parent=31 // pred_fallthru
          _
        // Predicated region
        $region57: #{tpu_custom_call.1} parent=31 // pred_check
          %p615 = pneg %p117
        $region58: #{tpu_custom_call.1} parent=31 // pred_check_branch
          %617 = sbr.rel (%p615) target = $region60
        $region59: #{tpu_custom_call.1} parent=31 // pred_region
          %619 = dma.done [#allocation5], 2048
        $region60: #{tpu_custom_call.1} parent=31 // pred_fallthru
          _
      $region32: #{tpu_custom_call.1} parent=5 // pred_fallthru
        _
      %p620 = scmp.le.s32.totalorder 2, %s14
      // Predicated region
      $region61: #{tpu_custom_call.1} parent=5 // pred_check
        %p621 = pneg %p620
      $region62: #{tpu_custom_call.1} parent=5 // pred_check_branch
        %623 = sbr.rel (%p621) target = $region64
      $region63: #{tpu_custom_call.1} parent=5 // pred_region
        %s624 = ssub.s32 %s14, 2
      $region64: #{tpu_custom_call.1} parent=5 // pred_fallthru
        _
    $region6: #{tpu_custom_call.1} parent=1 // loop_footer
      %s18 = sadd.s32 1, %s14
    $region7: #{tpu_custom_call.1} parent=1 // loop_footer_branch
      %13 = sbr.rel target = $region3
    $region8: #{tpu_custom_call.1} parent=1 // loop_exit
      _
    %625 = vsyncpa [#allocation4], 1
    %s626 = scalar_lea.sflag [#allocation4], 1
    %627 = vsyncpa %s626, 1
    %628 = vsyncpa [#allocation7], 1
    %s629 = scalar_lea.sflag [#allocation7], 1
    %630 = vsyncpa %s629, 1
    %631 = vsyncpa [#allocation5], 1
    %s632 = scalar_lea.sflag [#allocation5], 1
    %633 = vsyncpa %s632, 1

</llo_original>
